<compile_context>
chip_gen: v5e
topology: v5e:2x2
jax: 0.10.0
libtpu: 0.0.40
codegen_flags: <defaults>
</compile_context>

<pallas_src>
import jax
import jax.numpy as jnp
from jax.experimental import pallas as pl
from jax.experimental.pallas import tpu as pltpu

NEG_SLOPE = 0.01  # nn.LeakyReLU() default


def _leaky(v):
    return jnp.where(v >= 0, v, NEG_SLOPE * v)


def _gat_kernel(xtm_ref, xns_ref, w_ref, a1w_ref, b2_ref, seg_ref, o_ref):
    # xtm_ref: (T*N, D)   time-major rows r = t*N + j  -> x[j, t, :]
    # xns_ref: (N, T*D)   node-major lane-dense slab   -> x[i, t, d] at [i, t*D + d]
    # w_ref:   (D, D)
    # a1w_ref: (D, 1)     W @ a1 / scale
    # b2_ref:  (T*D, T*N) block-diagonal expansion of W @ a2 / scale
    # seg_ref: (T*N, T*D) time-segment indicator (sums over j, expands over d)
    # o_ref:   (N, T*D)
    TN, D = xtm_ref.shape
    N, TD = xns_ref.shape
    T = TD // D

    xtm = xtm_ref[...]

    # Three independent MXU pushes (no serial MXU->MXU dependency).
    Wx = jnp.dot(xtm, w_ref[...], preferred_element_type=jnp.float32)             # (T*N, D)
    s1c = jnp.dot(xtm, a1w_ref[...], preferred_element_type=jnp.float32)          # (T*N, 1)
    s2e = jnp.dot(xns_ref[...], b2_ref[...], preferred_element_type=jnp.float32)  # (N, T*N): s2[i,t] at [i, t*N+j]

    # The single row->lane relayout of the whole kernel: s1 column -> one
    # 128-lane row in t-major lane order (lane t*N + j holds s1[j, t]).
    s1r = jnp.transpose(s1c)                                                       # (1, T*N)

    # Batched attention scores for all T time steps in one (N, T*N) slab.
    score = _leaky(s1r + s2e)                                                      # (N, T*N)
    # Global per-row max: a per-row constant shift, exact for every 16-lane
    # segment's softmax and safe (exp <= 1, denominators bounded away from 0).
    m = jnp.max(score, axis=-1, keepdims=True)
    e = jnp.exp(score - m)                                                         # (N, T*N)

    # Per-(i, t) softmax denominators expanded directly to output lanes; this
    # MXU push overlaps the aggregation pushes below (all depend only on `e`).
    denom = jnp.dot(e, seg_ref[...], preferred_element_type=jnp.float32)           # (N, T*D)

    # Eight independent (N, N) @ (N, D) aggregation matmuls, back-to-back.
    # LHS: contiguous 16-lane slice of e; RHS: free full-sublane row slice of Wx.
    aggs = []
    for t in range(T):
        e_t = e[:, t * N:(t + 1) * N]                                              # (N, N)
        wx_t = Wx[t * N:(t + 1) * N, :]                                            # (N, D)
        aggs.append(jnp.dot(e_t, wx_t, preferred_element_type=jnp.float32))
    aggu = jnp.concatenate(aggs, axis=1)                                           # (N, T*D), unnormalized

    # Normalize after aggregation (identical to softmax-then-matmul; dropatt
    # with p = 0.0 is the identity).  reciprocal -> EUP slot.
    agg = _leaky(aggu * pl.reciprocal(denom, approx=True))

    # Single unmasked full-width (N, T*D) store.
    o_ref[...] = xns_ref[...] - agg


@jax.jit
def gat_forward(x, W, a1, a2):
    """x: (N, T, D) f32; W: (D, D); a1: (1, D); a2: (D, 1). Returns (N, T, D)."""
    N, T, D = x.shape
    scale = (D * 2) ** 0.5

    # Layout assumptions behind the "free reshape / lane-dense slab" choices
    # (hold for N=16, T=8, D=32; revisit if shapes change).
    assert N % 8 == 0 and D % 8 == 0, "sublane alignment assumption violated"
    assert (T * N) % 128 == 0 and (T * D) % 128 == 0, "lane-dense slab assumption violated"

    # One-time parameter transforms: fold W and 1/scale into both projections.
    w1c = (W @ a1.reshape(D)) / scale                                   # (D,)
    w2c = (W @ a2.reshape(D)) / scale                                   # (D,)
    a1w = w1c.reshape(D, 1)
    # Block-diagonal projection: b2[t*D+d, t'*N+j] = w2c[d] if t == t' else 0,
    # so (N, T*D) @ b2 lands s2[i, t] on every lane of segment t directly.
    b2 = jnp.kron(jnp.eye(T, dtype=jnp.float32),
                  w2c.reshape(D, 1) * jnp.ones((1, N), jnp.float32))    # (T*D, T*N)
    # Constant segment-sum matrix (pure constant -> XLA constant-folds it):
    # seg[t*N+j, t'*D+d] = 1 if t == t' else 0.
    seg = jnp.kron(jnp.eye(T, dtype=jnp.float32),
                   jnp.ones((N, D), jnp.float32))                       # (T*N, T*D)

    # Time-major rows for the feature/score matmuls (free per-t Wx row slices
    # in-kernel); node-major lane-dense slab (free HBM reshape) for the s2
    # expansion and the final subtraction / single-store output.
    x_tm = jnp.transpose(x, (1, 0, 2)).reshape(T * N, D)
    x_ns = x.reshape(N, T * D)

    out_flat = pl.pallas_call(
        _gat_kernel,
        out_shape=jax.ShapeDtypeStruct((N, T * D), jnp.float32),
        in_specs=[pl.BlockSpec(memory_space=pltpu.MemorySpace.VMEM)] * 6,
        out_specs=pl.BlockSpec(memory_space=pltpu.MemorySpace.VMEM),
    )(x_tm, x_ns, W, a1w, b2, seg)

    # Free reshape back to the module's layout.
    return out_flat.reshape(N, T, D)


def gat_reference(x, W, a1, a2):
    """Pure-JAX replica of the PyTorch forward (return_attn=False, p=0.0)."""
    N, T, D = x.shape
    scale = (D * 2) ** 0.5
    Wx = x @ W                                           # (N, T, D)
    x1 = (Wx @ a1.reshape(D) / scale).T[:, None, :]      # (T, 1, N)
    x2 = (Wx @ a2.reshape(D) / scale).T[:, :, None]      # (T, N, 1)
    score = _leaky(x1 + x2)                              # (T, N, N)
    weight = jax.nn.softmax(score, axis=-1)
    agg = _leaky(weight @ jnp.transpose(Wx, (1, 0, 2)))  # (T, N, D)
    return x - jnp.transpose(agg, (1, 0, 2))


if __name__ == "__main__":
    N, T, D = 16, 8, 32
    key = jax.random.PRNGKey(0)
    kx, k1, k2, kw = jax.random.split(key, 4)

    # reset_parameters(): a1, a2 xavier_normal; W = identity.
    xavier_std = (2.0 / (D + 1)) ** 0.5
    a1 = xavier_std * jax.random.normal(k1, (1, D), dtype=jnp.float32)
    a2 = xavier_std * jax.random.normal(k2, (D, 1), dtype=jnp.float32)
    x = jax.random.normal(kx, (N, T, D), dtype=jnp.float32)

    W_id = jnp.eye(D, dtype=jnp.float32)  # module init
    # Random (non-symmetric) W also checked — catches accidental W transposes.
    W_rnd = W_id + 0.2 * jax.random.normal(kw, (D, D), dtype=jnp.float32) / (D ** 0.5)

    for W in (W_id, W_rnd):
        out = jax.block_until_ready(gat_forward(x, W, a1, a2))
        ref = gat_reference(x, W, a1, a2)
        assert out.shape == (N, T, D)
        # Tolerance accounts for pl.reciprocal(approx=True) (~2^-12 rel error).
        err = jnp.max(jnp.abs(out - ref))
        assert jnp.allclose(out, ref, atol=2e-3, rtol=2e-3), \
            f"mismatch vs reference (max abs err {err})"

    print("KERNEL_OK")
</pallas_src>

<mosaic_0001>
module attributes {stable_mosaic.version = 11 : i64} {
  func.func @_gat_kernel(%arg0: memref<128x32xf32, #tpu.memory_space<vmem>>, %arg1: memref<16x256xf32, #tpu.memory_space<vmem>>, %arg2: memref<32x32xf32, #tpu.memory_space<vmem>>, %arg3: memref<32x1xf32, #tpu.memory_space<vmem>>, %arg4: memref<256x128xf32, #tpu.memory_space<vmem>>, %arg5: memref<128x256xf32, #tpu.memory_space<vmem>>, %arg6: memref<16x256xf32, #tpu.memory_space<vmem>>) attributes {dimension_semantics = [], scalar_prefetch = 0 : i64, scratch_operands = 0 : i64, tpu.core_type = #tpu.core_type<tc>} {
    %c0 = arith.constant 0 : index
    %c0_0 = arith.constant 0 : index
    %0 = vector.load %arg0[%c0, %c0_0] : memref<128x32xf32, #tpu.memory_space<vmem>>, vector<128x32xf32>
    %c0_1 = arith.constant 0 : index
    %c0_2 = arith.constant 0 : index
    %1 = vector.load %arg2[%c0_1, %c0_2] : memref<32x32xf32, #tpu.memory_space<vmem>>, vector<32x32xf32>
    %cst = arith.constant dense<0.000000e+00> : vector<128x32xf32>
    %2 = tpu.matmul %0, %1, %cst {dimension_numbers = #tpu.dot_dimension_numbers<[1], [0], [0], [1], [0, 0, 1, 1], [], []>} : vector<128x32xf32>, vector<32x32xf32>, vector<128x32xf32> -> vector<128x32xf32>
    %c0_3 = arith.constant 0 : index
    %c0_4 = arith.constant 0 : index
    %3 = vector.load %arg3[%c0_3, %c0_4] : memref<32x1xf32, #tpu.memory_space<vmem>>, vector<32x1xf32>
    %cst_5 = arith.constant dense<0.000000e+00> : vector<128x1xf32>
    %4 = tpu.matmul %0, %3, %cst_5 {dimension_numbers = #tpu.dot_dimension_numbers<[1], [0], [0], [1], [0, 0, 1, 1], [], []>} : vector<128x32xf32>, vector<32x1xf32>, vector<128x1xf32> -> vector<128x1xf32>
    %c0_6 = arith.constant 0 : index
    %c0_7 = arith.constant 0 : index
    %5 = vector.load %arg1[%c0_6, %c0_7] : memref<16x256xf32, #tpu.memory_space<vmem>>, vector<16x256xf32>
    %c0_8 = arith.constant 0 : index
    %c0_9 = arith.constant 0 : index
    %6 = vector.load %arg4[%c0_8, %c0_9] : memref<256x128xf32, #tpu.memory_space<vmem>>, vector<256x128xf32>
    %cst_10 = arith.constant dense<0.000000e+00> : vector<16x128xf32>
    %7 = tpu.matmul %5, %6, %cst_10 {dimension_numbers = #tpu.dot_dimension_numbers<[1], [0], [0], [1], [0, 0, 1, 1], [], []>} : vector<16x256xf32>, vector<256x128xf32>, vector<16x128xf32> -> vector<16x128xf32>
    %8 = tpu.transpose %4, [1, 0] : vector<128x1xf32> -> vector<1x128xf32>
    %9 = vector.broadcast %8 : vector<1x128xf32> to vector<16x128xf32>
    %10 = arith.addf %9, %7 : vector<16x128xf32>
    %cst_11 = arith.constant 0.000000e+00 : f32
    %11 = vector.broadcast %cst_11 : f32 to vector<16x128xf32>
    %12 = arith.cmpf oge, %10, %11 : vector<16x128xf32>
    %cst_12 = arith.constant 0.00999999977 : f32
    %13 = vector.broadcast %cst_12 : f32 to vector<16x128xf32>
    %14 = arith.mulf %13, %10 : vector<16x128xf32>
    %15 = arith.select %12, %10, %14 : vector<16x128xi1>, vector<16x128xf32>
    %cst_13 = arith.constant dense<0xFF800000> : vector<16xf32>
    %16 = vector.multi_reduction <maximumf>, %15, %cst_13 [1] : vector<16x128xf32> to vector<16xf32>
    %17 = vector.shape_cast %16 : vector<16xf32> to vector<16x1xf32>
    %18 = vector.broadcast %17 : vector<16x1xf32> to vector<16x128xf32>
    %19 = arith.subf %15, %18 : vector<16x128xf32>
    %20 = math.exp %19 : vector<16x128xf32>
    %c0_14 = arith.constant 0 : index
    %c0_15 = arith.constant 0 : index
    %21 = vector.load %arg5[%c0_14, %c0_15] : memref<128x256xf32, #tpu.memory_space<vmem>>, vector<128x256xf32>
    %cst_16 = arith.constant dense<0.000000e+00> : vector<16x256xf32>
    %22 = tpu.matmul %20, %21, %cst_16 {dimension_numbers = #tpu.dot_dimension_numbers<[1], [0], [0], [1], [0, 0, 1, 1], [], []>} : vector<16x128xf32>, vector<128x256xf32>, vector<16x256xf32> -> vector<16x256xf32>
    %23 = vector.extract_strided_slice %20 {offsets = [0, 0], sizes = [16, 16], strides = [1, 1]} : vector<16x128xf32> to vector<16x16xf32>
    %24 = vector.extract_strided_slice %2 {offsets = [0, 0], sizes = [16, 32], strides = [1, 1]} : vector<128x32xf32> to vector<16x32xf32>
    %cst_17 = arith.constant dense<0.000000e+00> : vector<16x32xf32>
    %25 = tpu.matmul %23, %24, %cst_17 {dimension_numbers = #tpu.dot_dimension_numbers<[1], [0], [0], [1], [0, 0, 1, 1], [], []>} : vector<16x16xf32>, vector<16x32xf32>, vector<16x32xf32> -> vector<16x32xf32>
    %26 = vector.extract_strided_slice %20 {offsets = [0, 16], sizes = [16, 16], strides = [1, 1]} : vector<16x128xf32> to vector<16x16xf32>
    %27 = vector.extract_strided_slice %2 {offsets = [16, 0], sizes = [16, 32], strides = [1, 1]} : vector<128x32xf32> to vector<16x32xf32>
    %cst_18 = arith.constant dense<0.000000e+00> : vector<16x32xf32>
    %28 = tpu.matmul %26, %27, %cst_18 {dimension_numbers = #tpu.dot_dimension_numbers<[1], [0], [0], [1], [0, 0, 1, 1], [], []>} : vector<16x16xf32>, vector<16x32xf32>, vector<16x32xf32> -> vector<16x32xf32>
    %29 = vector.extract_strided_slice %20 {offsets = [0, 32], sizes = [16, 16], strides = [1, 1]} : vector<16x128xf32> to vector<16x16xf32>
    %30 = vector.extract_strided_slice %2 {offsets = [32, 0], sizes = [16, 32], strides = [1, 1]} : vector<128x32xf32> to vector<16x32xf32>
    %cst_19 = arith.constant dense<0.000000e+00> : vector<16x32xf32>
    %31 = tpu.matmul %29, %30, %cst_19 {dimension_numbers = #tpu.dot_dimension_numbers<[1], [0], [0], [1], [0, 0, 1, 1], [], []>} : vector<16x16xf32>, vector<16x32xf32>, vector<16x32xf32> -> vector<16x32xf32>
    %32 = vector.extract_strided_slice %20 {offsets = [0, 48], sizes = [16, 16], strides = [1, 1]} : vector<16x128xf32> to vector<16x16xf32>
    %33 = vector.extract_strided_slice %2 {offsets = [48, 0], sizes = [16, 32], strides = [1, 1]} : vector<128x32xf32> to vector<16x32xf32>
    %cst_20 = arith.constant dense<0.000000e+00> : vector<16x32xf32>
    %34 = tpu.matmul %32, %33, %cst_20 {dimension_numbers = #tpu.dot_dimension_numbers<[1], [0], [0], [1], [0, 0, 1, 1], [], []>} : vector<16x16xf32>, vector<16x32xf32>, vector<16x32xf32> -> vector<16x32xf32>
    %35 = vector.extract_strided_slice %20 {offsets = [0, 64], sizes = [16, 16], strides = [1, 1]} : vector<16x128xf32> to vector<16x16xf32>
    %36 = vector.extract_strided_slice %2 {offsets = [64, 0], sizes = [16, 32], strides = [1, 1]} : vector<128x32xf32> to vector<16x32xf32>
    %cst_21 = arith.constant dense<0.000000e+00> : vector<16x32xf32>
    %37 = tpu.matmul %35, %36, %cst_21 {dimension_numbers = #tpu.dot_dimension_numbers<[1], [0], [0], [1], [0, 0, 1, 1], [], []>} : vector<16x16xf32>, vector<16x32xf32>, vector<16x32xf32> -> vector<16x32xf32>
    %38 = vector.extract_strided_slice %20 {offsets = [0, 80], sizes = [16, 16], strides = [1, 1]} : vector<16x128xf32> to vector<16x16xf32>
    %39 = vector.extract_strided_slice %2 {offsets = [80, 0], sizes = [16, 32], strides = [1, 1]} : vector<128x32xf32> to vector<16x32xf32>
    %cst_22 = arith.constant dense<0.000000e+00> : vector<16x32xf32>
    %40 = tpu.matmul %38, %39, %cst_22 {dimension_numbers = #tpu.dot_dimension_numbers<[1], [0], [0], [1], [0, 0, 1, 1], [], []>} : vector<16x16xf32>, vector<16x32xf32>, vector<16x32xf32> -> vector<16x32xf32>
    %41 = vector.extract_strided_slice %20 {offsets = [0, 96], sizes = [16, 16], strides = [1, 1]} : vector<16x128xf32> to vector<16x16xf32>
    %42 = vector.extract_strided_slice %2 {offsets = [96, 0], sizes = [16, 32], strides = [1, 1]} : vector<128x32xf32> to vector<16x32xf32>
    %cst_23 = arith.constant dense<0.000000e+00> : vector<16x32xf32>
    %43 = tpu.matmul %41, %42, %cst_23 {dimension_numbers = #tpu.dot_dimension_numbers<[1], [0], [0], [1], [0, 0, 1, 1], [], []>} : vector<16x16xf32>, vector<16x32xf32>, vector<16x32xf32> -> vector<16x32xf32>
    %44 = vector.extract_strided_slice %20 {offsets = [0, 112], sizes = [16, 16], strides = [1, 1]} : vector<16x128xf32> to vector<16x16xf32>
    %45 = vector.extract_strided_slice %2 {offsets = [112, 0], sizes = [16, 32], strides = [1, 1]} : vector<128x32xf32> to vector<16x32xf32>
    %cst_24 = arith.constant dense<0.000000e+00> : vector<16x32xf32>
    %46 = tpu.matmul %44, %45, %cst_24 {dimension_numbers = #tpu.dot_dimension_numbers<[1], [0], [0], [1], [0, 0, 1, 1], [], []>} : vector<16x16xf32>, vector<16x32xf32>, vector<16x32xf32> -> vector<16x32xf32>
    %47 = tpu.concatenate %25, %28, %31, %34, %37, %40, %43, %46 in 1 : vector<16x32xf32>, vector<16x32xf32>, vector<16x32xf32>, vector<16x32xf32>, vector<16x32xf32>, vector<16x32xf32>, vector<16x32xf32>, vector<16x32xf32> -> vector<16x256xf32>
    %48 = tpu.reciprocal %22 {approx = true} : vector<16x256xf32> -> vector<16x256xf32>
    %49 = arith.mulf %47, %48 : vector<16x256xf32>
    %cst_25 = arith.constant 0.000000e+00 : f32
    %50 = vector.broadcast %cst_25 : f32 to vector<16x256xf32>
    %51 = arith.cmpf oge, %49, %50 : vector<16x256xf32>
    %cst_26 = arith.constant 0.00999999977 : f32
    %52 = vector.broadcast %cst_26 : f32 to vector<16x256xf32>
    %53 = arith.mulf %52, %49 : vector<16x256xf32>
    %54 = arith.select %51, %49, %53 : vector<16x256xi1>, vector<16x256xf32>
    %c0_27 = arith.constant 0 : index
    %c0_28 = arith.constant 0 : index
    %55 = vector.load %arg1[%c0_27, %c0_28] : memref<16x256xf32, #tpu.memory_space<vmem>>, vector<16x256xf32>
    %56 = arith.subf %55, %54 : vector<16x256xf32>
    %c0_29 = arith.constant 0 : index
    %c0_30 = arith.constant 0 : index
    %57 = vector.load %arg6[%c0_29, %c0_30] : memref<16x256xf32, #tpu.memory_space<vmem>>, vector<16x256xf32>
    tpu.vector_store %arg6[%c0_29, %c0_30], %56 {strides = array<i32>} : memref<16x256xf32, #tpu.memory_space<vmem>>, vector<16x256xf32>,
    return
  }
}

</mosaic_0001>

<llo_original>
// kernel: gat_forward.1
$region0: #{gat_forward.1}
  #allocation0 [shape = 'u32[]', space=smem, size = 0x4, offset = 0x4, fixed_abs, tag = 'smem constant byte address 0x4 - core index']
  #allocation1 [shape = 'u32[72,128]{1,0:T(1,128)}', space=vmem, size = 0x9000, scoped, tag = 'internal scratch']
  %s0 = inlined_call_operand.vmem [shape: f32[128,32], index: 0, kind: input, shape index: {}]
  %s1 = inlined_call_operand.vmem [shape: f32[16,256], index: 1, kind: input, shape index: {}]
  %s2 = inlined_call_operand.vmem [shape: f32[32,32], index: 2, kind: input, shape index: {}]
  %s3 = inlined_call_operand.vmem [shape: f32[32,1], index: 3, kind: input, shape index: {}]
  %s4 = inlined_call_operand.vmem [shape: f32[256,128], index: 4, kind: input, shape index: {}]
  %s5 = inlined_call_operand.vmem [shape: f32[128,256], index: 5, kind: input, shape index: {}]
  %s6 = inlined_call_operand.vmem [shape: f32[16,256], index: 6, kind: output, shape index: {}]
  %s7 = sld [smem:[#allocation0]]
  $region34: #{gat_forward.1} parent=0
    _
  %s9 = ssub.s32 1, %s7
  %s10 = scalar_select 0, %s9, %s7
  // Predicated region
  $region2: #{gat_forward.1} parent=0 // pred_check
    _
  $region3: #{gat_forward.1} parent=0 // pred_check_branch
    %12 = sbr.rel (0) target = $region5
  $region4: #{gat_forward.1} parent=0 // pred_region
    _
  $region5: #{gat_forward.1} parent=0 // pred_fallthru
    _
  // Predicated region
  $region6: #{gat_forward.1} parent=0 // pred_check
    _
  $region7: #{gat_forward.1} parent=0 // pred_check_branch
    %14 = sbr.rel (0) target = $region9
  $region8: #{gat_forward.1} parent=0 // pred_region
    _
  $region9: #{gat_forward.1} parent=0 // pred_fallthru
    _
  // Predicated region
  $region10: #{gat_forward.1} parent=0 // pred_check
    _
  $region11: #{gat_forward.1} parent=0 // pred_check_branch
    %16 = sbr.rel (0) target = $region13
  $region12: #{gat_forward.1} parent=0 // pred_region
    _
  $region13: #{gat_forward.1} parent=0 // pred_fallthru
    _
  // Predicated region
  $region14: #{gat_forward.1} parent=0 // pred_check
    _
  $region15: #{gat_forward.1} parent=0 // pred_check_branch
    %18 = sbr.rel (0) target = $region17
  $region16: #{gat_forward.1} parent=0 // pred_region
    _
  $region17: #{gat_forward.1} parent=0 // pred_fallthru
    _
  // Predicated region
  $region18: #{gat_forward.1} parent=0 // pred_check
    _
  $region19: #{gat_forward.1} parent=0 // pred_check_branch
    %20 = sbr.rel (0) target = $region21
  $region20: #{gat_forward.1} parent=0 // pred_region
    _
  $region21: #{gat_forward.1} parent=0 // pred_fallthru
    _
  // Predicated region
  $region22: #{gat_forward.1} parent=0 // pred_check
    _
  $region23: #{gat_forward.1} parent=0 // pred_check_branch
    %22 = sbr.rel (0) target = $region25
  $region24: #{gat_forward.1} parent=0 // pred_region
    _
  $region25: #{gat_forward.1} parent=0 // pred_fallthru
    _
  %v23 = vld [vmem:[%s0] sm:$0xff]
  %v24 = vld [vmem:[%s0 + $0x8] sm:$0xff]
  %v25 = vld [vmem:[%s0 + $0x10] sm:$0xff]
  %v26 = vld [vmem:[%s0 + $0x18] sm:$0xff]
  %v27 = vld [vmem:[%s0 + $0x20] sm:$0xff]
  %v28 = vld [vmem:[%s0 + $0x28] sm:$0xff]
  %v29 = vld [vmem:[%s0 + $0x30] sm:$0xff]
  %v30 = vld [vmem:[%s0 + $0x38] sm:$0xff]
  %v31 = vld [vmem:[%s0 + $0x40] sm:$0xff]
  %v32 = vld [vmem:[%s0 + $0x48] sm:$0xff]
  %v33 = vld [vmem:[%s0 + $0x50] sm:$0xff]
  %v34 = vld [vmem:[%s0 + $0x58] sm:$0xff]
  %v35 = vld [vmem:[%s0 + $0x60] sm:$0xff]
  %v36 = vld [vmem:[%s0 + $0x68] sm:$0xff]
  %v37 = vld [vmem:[%s0 + $0x70] sm:$0xff]
  %v38 = vld [vmem:[%s0 + $0x78] sm:$0xff]
  %v39 = vld [vmem:[%s2] sm:$0xff]
  %v40 = vld [vmem:[%s2 + $0x8] sm:$0xff]
  %v41 = vld [vmem:[%s2 + $0x10] sm:$0xff]
  %v42 = vld [vmem:[%s2 + $0x18] sm:$0xff]
  %vm43 = vcmask 261120
  %v45 = vsel %vm43, %v23, 0
  %v48 = vsel %vm43, %v24, 0
  %v51 = vsel %vm43, %v25, 0
  %v54 = vsel %vm43, %v26, 0
  %v57 = vsel %vm43, %v27, 0
  %v60 = vsel %vm43, %v28, 0
  %v63 = vsel %vm43, %v29, 0
  %v66 = vsel %vm43, %v30, 0
  %v69 = vsel %vm43, %v31, 0
  %v72 = vsel %vm43, %v32, 0
  %v75 = vsel %vm43, %v33, 0
  %v78 = vsel %vm43, %v34, 0
  %v81 = vsel %vm43, %v35, 0
  %v84 = vsel %vm43, %v36, 0
  %v87 = vsel %vm43, %v37, 0
  %v90 = vsel %vm43, %v38, 0
  %92 = vmatpush.msra.mxu0 0.0
  %93 = vmatpush.msra.mxu0 0.0
  %94 = vmatpush.msra.mxu0 0.0
  %95 = vmatpush.msra.mxu0 0.0
  %96 = vmatpush.msra.mxu0 0.0
  %97 = vmatpush.msra.mxu0 0.0
  %98 = vmatpush.msra.mxu0 0.0
  %99 = vmatpush.msra.mxu0 0.0
  %100 = vmatpush.msra.mxu0 0.0
  %101 = vmatpush.msra.mxu0 0.0
  %102 = vmatpush.msra.mxu0 0.0
  %103 = vmatpush.msra.mxu0 0.0
  %104 = vmatpush.msra.mxu0 %v42
  %105 = vmatpush.msra.mxu0 %v41
  %106 = vmatpush.msra.mxu0 %v40
  %107 = vmatpush.msra.mxu0 %v39
  %108 = vmatmul.f32.gmra.mxu0 %v45
  %v109 = vpop.f32.mrf.mxu0
  %v110 = vadd.f32 0.0, %v109
  %111 = vmatmul.f32.gmra.mxu0 %v48
  %v112 = vpop.f32.mrf.mxu0
  %v113 = vadd.f32 0.0, %v112
  %114 = vmatmul.f32.gmra.mxu0 %v51
  %v115 = vpop.f32.mrf.mxu0
  %v116 = vadd.f32 0.0, %v115
  %117 = vmatmul.f32.gmra.mxu0 %v54
  %v118 = vpop.f32.mrf.mxu0
  %v119 = vadd.f32 0.0, %v118
  %120 = vmatmul.f32.gmra.mxu0 %v57
  %v121 = vpop.f32.mrf.mxu0
  %v122 = vadd.f32 0.0, %v121
  %123 = vmatmul.f32.gmra.mxu0 %v60
  %v124 = vpop.f32.mrf.mxu0
  %v125 = vadd.f32 0.0, %v124
  %126 = vmatmul.f32.gmra.mxu0 %v63
  %v127 = vpop.f32.mrf.mxu0
  %v128 = vadd.f32 0.0, %v127
  %129 = vmatmul.f32.gmra.mxu0 %v66
  %v130 = vpop.f32.mrf.mxu0
  %v131 = vadd.f32 0.0, %v130
  %132 = vmatmul.f32.gmra.mxu0 %v69
  %v133 = vpop.f32.mrf.mxu0
  %v134 = vadd.f32 0.0, %v133
  %135 = vmatmul.f32.gmra.mxu0 %v72
  %v136 = vpop.f32.mrf.mxu0
  %v137 = vadd.f32 0.0, %v136
  %138 = vmatmul.f32.gmra.mxu0 %v75
  %v139 = vpop.f32.mrf.mxu0
  %v140 = vadd.f32 0.0, %v139
  %141 = vmatmul.f32.gmra.mxu0 %v78
  %v142 = vpop.f32.mrf.mxu0
  %v143 = vadd.f32 0.0, %v142
  %144 = vmatmul.f32.gmra.mxu0 %v81
  %v145 = vpop.f32.mrf.mxu0
  %v146 = vadd.f32 0.0, %v145
  %147 = vmatmul.f32.gmra.mxu0 %v84
  %v148 = vpop.f32.mrf.mxu0
  %v149 = vadd.f32 0.0, %v148
  %150 = vmatmul.f32.gmra.mxu0 %v87
  %v151 = vpop.f32.mrf.mxu0
  %v152 = vadd.f32 0.0, %v151
  %153 = vmatmul.f32.gmra.mxu0 %v90
  %v154 = vpop.f32.mrf.mxu0
  %v155 = vadd.f32 0.0, %v154
  %156 = vdwg.mxu0
  %v157 = vld [vmem:[%s3] sm:$0xff]
  %v158 = vld [vmem:[%s3 + $0x8] sm:$0xff]
  %v159 = vld [vmem:[%s3 + $0x10] sm:$0xff]
  %v160 = vld [vmem:[%s3 + $0x18] sm:$0xff]
  %161 = vmatpush.msra.mxu0 0.0
  %162 = vmatpush.msra.mxu0 0.0
  %163 = vmatpush.msra.mxu0 0.0
  %164 = vmatpush.msra.mxu0 0.0
  %165 = vmatpush.msra.mxu0 0.0
  %166 = vmatpush.msra.mxu0 0.0
  %167 = vmatpush.msra.mxu0 0.0
  %168 = vmatpush.msra.mxu0 0.0
  %169 = vmatpush.msra.mxu0 0.0
  %170 = vmatpush.msra.mxu0 0.0
  %171 = vmatpush.msra.mxu0 0.0
  %172 = vmatpush.msra.mxu0 0.0
  %173 = vmatpush.msra.mxu0 %v160
  %174 = vmatpush.msra.mxu0 %v159
  %175 = vmatpush.msra.mxu0 %v158
  %176 = vmatpush.msra.mxu0 %v157
  %177 = vmatmul.f32.gmra.mxu0 %v45
  %v178 = vpop.f32.mrf.mxu0
  %v179 = vadd.f32 0.0, %v178
  %180 = vmatmul.f32.gmra.mxu0 %v48
  %v181 = vpop.f32.mrf.mxu0
  %v182 = vadd.f32 0.0, %v181
  %183 = vmatmul.f32.gmra.mxu0 %v51
  %v184 = vpop.f32.mrf.mxu0
  %v185 = vadd.f32 0.0, %v184
  %186 = vmatmul.f32.gmra.mxu0 %v54
  %v187 = vpop.f32.mrf.mxu0
  %v188 = vadd.f32 0.0, %v187
  %189 = vmatmul.f32.gmra.mxu0 %v57
  %v190 = vpop.f32.mrf.mxu0
  %v191 = vadd.f32 0.0, %v190
  %192 = vmatmul.f32.gmra.mxu0 %v60
  %v193 = vpop.f32.mrf.mxu0
  %v194 = vadd.f32 0.0, %v193
  %195 = vmatmul.f32.gmra.mxu0 %v63
  %v196 = vpop.f32.mrf.mxu0
  %v197 = vadd.f32 0.0, %v196
  %198 = vmatmul.f32.gmra.mxu0 %v66
  %v199 = vpop.f32.mrf.mxu0
  %v200 = vadd.f32 0.0, %v199
  %201 = vmatmul.f32.gmra.mxu0 %v69
  %v202 = vpop.f32.mrf.mxu0
  %v203 = vadd.f32 0.0, %v202
  %204 = vmatmul.f32.gmra.mxu0 %v72
  %v205 = vpop.f32.mrf.mxu0
  %v206 = vadd.f32 0.0, %v205
  %207 = vmatmul.f32.gmra.mxu0 %v75
  %v208 = vpop.f32.mrf.mxu0
  %v209 = vadd.f32 0.0, %v208
  %210 = vmatmul.f32.gmra.mxu0 %v78
  %v211 = vpop.f32.mrf.mxu0
  %v212 = vadd.f32 0.0, %v211
  %213 = vmatmul.f32.gmra.mxu0 %v81
  %v214 = vpop.f32.mrf.mxu0
  %v215 = vadd.f32 0.0, %v214
  %216 = vmatmul.f32.gmra.mxu0 %v84
  %v217 = vpop.f32.mrf.mxu0
  %v218 = vadd.f32 0.0, %v217
  %219 = vmatmul.f32.gmra.mxu0 %v87
  %v220 = vpop.f32.mrf.mxu0
  %v221 = vadd.f32 0.0, %v220
  %222 = vmatmul.f32.gmra.mxu0 %v90
  %v223 = vpop.f32.mrf.mxu0
  %v224 = vadd.f32 0.0, %v223
  %225 = vdwg.mxu0
  %v226 = vld [vmem:[%s1] sm:$0xff]
  %v227 = vld [vmem:[%s1 + $0x8] sm:$0xff]
  %v228 = vld [vmem:[%s1 + $0x10] sm:$0xff]
  %v229 = vld [vmem:[%s1 + $0x18] sm:$0xff]
  %v230 = vld [vmem:[%s4] sm:$0xff]
  %v231 = vld [vmem:[%s4 + $0x8] sm:$0xff]
  %v232 = vld [vmem:[%s4 + $0x10] sm:$0xff]
  %v233 = vld [vmem:[%s4 + $0x18] sm:$0xff]
  %v234 = vld [vmem:[%s4 + $0x20] sm:$0xff]
  %v235 = vld [vmem:[%s4 + $0x28] sm:$0xff]
  %v236 = vld [vmem:[%s4 + $0x30] sm:$0xff]
  %v237 = vld [vmem:[%s4 + $0x38] sm:$0xff]
  %v238 = vld [vmem:[%s4 + $0x40] sm:$0xff]
  %v239 = vld [vmem:[%s4 + $0x48] sm:$0xff]
  %v240 = vld [vmem:[%s4 + $0x50] sm:$0xff]
  %v241 = vld [vmem:[%s4 + $0x58] sm:$0xff]
  %v242 = vld [vmem:[%s4 + $0x60] sm:$0xff]
  %v243 = vld [vmem:[%s4 + $0x68] sm:$0xff]
  %v244 = vld [vmem:[%s4 + $0x70] sm:$0xff]
  %v245 = vld [vmem:[%s4 + $0x78] sm:$0xff]
  %v246 = vld [vmem:[%s4 + $0x80] sm:$0xff]
  %v247 = vld [vmem:[%s4 + $0x88] sm:$0xff]
  %v248 = vld [vmem:[%s4 + $0x90] sm:$0xff]
  %v249 = vld [vmem:[%s4 + $0x98] sm:$0xff]
  %v250 = vld [vmem:[%s4 + $0xa0] sm:$0xff]
  %v251 = vld [vmem:[%s4 + $0xa8] sm:$0xff]
  %v252 = vld [vmem:[%s4 + $0xb0] sm:$0xff]
  %v253 = vld [vmem:[%s4 + $0xb8] sm:$0xff]
  %v254 = vld [vmem:[%s4 + $0xc0] sm:$0xff]
  %v255 = vld [vmem:[%s4 + $0xc8] sm:$0xff]
  %v256 = vld [vmem:[%s4 + $0xd0] sm:$0xff]
  %v257 = vld [vmem:[%s4 + $0xd8] sm:$0xff]
  %v258 = vld [vmem:[%s4 + $0xe0] sm:$0xff]
  %v259 = vld [vmem:[%s4 + $0xe8] sm:$0xff]
  %v260 = vld [vmem:[%s4 + $0xf0] sm:$0xff]
  %v261 = vld [vmem:[%s4 + $0xf8] sm:$0xff]
  %262 = vmatpush.msra.mxu0 %v245
  %263 = vmatpush.msra.mxu0 %v244
  %264 = vmatpush.msra.mxu0 %v243
  %265 = vmatpush.msra.mxu0 %v242
  %266 = vmatpush.msra.mxu0 %v241
  %267 = vmatpush.msra.mxu0 %v240
  %268 = vmatpush.msra.mxu0 %v239
  %269 = vmatpush.msra.mxu0 %v238
  %270 = vmatpush.msra.mxu0 %v237
  %271 = vmatpush.msra.mxu0 %v236
  %272 = vmatpush.msra.mxu0 %v235
  %273 = vmatpush.msra.mxu0 %v234
  %274 = vmatpush.msra.mxu0 %v233
  %275 = vmatpush.msra.mxu0 %v232
  %276 = vmatpush.msra.mxu0 %v231
  %277 = vmatpush.msra.mxu0 %v230
  %278 = vmatmul.f32.gmra.mxu0 %v226
  %v279 = vpop.f32.mrf.mxu0
  %v280 = vadd.f32 0.0, %v279
  %281 = vmatmul.f32.gmra.mxu0 %v228
  %v282 = vpop.f32.mrf.mxu0
  %v283 = vadd.f32 0.0, %v282
  %284 = vdwg.mxu0
  %285 = vmatpush.msra.mxu0 %v261
  %286 = vmatpush.msra.mxu0 %v260
  %287 = vmatpush.msra.mxu0 %v259
  %288 = vmatpush.msra.mxu0 %v258
  %289 = vmatpush.msra.mxu0 %v257
  %290 = vmatpush.msra.mxu0 %v256
  %291 = vmatpush.msra.mxu0 %v255
  %292 = vmatpush.msra.mxu0 %v254
  %293 = vmatpush.msra.mxu0 %v253
  %294 = vmatpush.msra.mxu0 %v252
  %295 = vmatpush.msra.mxu0 %v251
  %296 = vmatpush.msra.mxu0 %v250
  %297 = vmatpush.msra.mxu0 %v249
  %298 = vmatpush.msra.mxu0 %v248
  %299 = vmatpush.msra.mxu0 %v247
  %300 = vmatpush.msra.mxu0 %v246
  %301 = vmatmul.f32.gmra.mxu0 %v227
  %v302 = vpop.f32.mrf.mxu0
  %v303 = vadd.f32 %v280, %v302
  %304 = vmatmul.f32.gmra.mxu0 %v229
  %v305 = vpop.f32.mrf.mxu0
  %v306 = vadd.f32 %v283, %v305
  %307 = vdwg.mxu0
  %308 = vxpose.xlu0.b32.start [1/16] %v179, 128
  %309 = vxpose.xlu0.b32.cont [2/16] %v182, 128
  %310 = vxpose.xlu0.b32.cont [3/16] %v185, 128
  %311 = vxpose.xlu0.b32.cont [4/16] %v188, 128
  %312 = vxpose.xlu0.b32.cont [5/16] %v191, 128
  %313 = vxpose.xlu0.b32.cont [6/16] %v194, 128
  %314 = vxpose.xlu0.b32.cont [7/16] %v197, 128
  %315 = vxpose.xlu0.b32.cont [8/16] %v200, 128
  %316 = vxpose.xlu0.b32.cont [9/16] %v203, 128
  %317 = vxpose.xlu0.b32.cont [10/16] %v206, 128
  %318 = vxpose.xlu0.b32.cont [11/16] %v209, 128
  %319 = vxpose.xlu0.b32.cont [12/16] %v212, 128
  %320 = vxpose.xlu0.b32.cont [13/16] %v215, 128
  %321 = vxpose.xlu0.b32.cont [14/16] %v218, 128
  %322 = vxpose.xlu0.b32.cont [15/16] %v221, 128
  %323 = vxpose.xlu0.b32.end [16/16] %v224, 128
  %v324 = vpop.trf.xlu0
  %v325 = vpop.trf.xlu0
  %v326 = vpop.trf.xlu0
  %v327 = vpop.trf.xlu0
  %v328 = vpop.trf.xlu0
  %v329 = vpop.trf.xlu0
  %v330 = vpop.trf.xlu0
  %v331 = vpop.trf.xlu0
  %v332 = vpop.trf.xlu0
  %v333 = vpop.trf.xlu0
  %v334 = vpop.trf.xlu0
  %v335 = vpop.trf.xlu0
  %v336 = vpop.trf.xlu0
  %v337 = vpop.trf.xlu0
  %v338 = vpop.trf.xlu0
  %v339 = vpop.trf.xlu0
  %v340 = vperm.slane %v324, 0
  %v341 = vadd.f32 %v340, %v303
  %v342 = vadd.f32 %v340, %v306
  %vm343 = vcmp.ge.f32.partialorder %v341, 0.0
  %vm344 = vcmp.ge.f32.partialorder %v342, 0.0
  %v345 = vmul.f32 %v341, 0.01
  %v346 = vmul.f32 %v342, 0.01
  %v347 = vsel %vm343, %v341, %v345
  %v348 = vsel %vm344, %v342, %v346
  %349 = vmax.xlane.f32.xlu0 %v347
  %v350 = vpop.xlane.xlu0 %349
  %351 = vmax.xlane.f32.xlu0 %v348
  %v352 = vpop.xlane.xlu0 %351
  %v353 = vsub.f32 %v347, %v350
  %v354 = vsub.f32 %v348, %v352
  %v355 = vmul.f32 %v353, 1.442695
  %v356 = vpow.pop %v355
  %v357 = vmul.f32 %v354, 1.442695
  %v358 = vpow.pop %v357
  %v359 = vld [vmem:[%s5] sm:$0xff]
  %v360 = vld [vmem:[%s5 + $0x8] sm:$0xff]
  %v361 = vld [vmem:[%s5 + $0x10] sm:$0xff]
  %v362 = vld [vmem:[%s5 + $0x18] sm:$0xff]
  %v363 = vld [vmem:[%s5 + $0x20] sm:$0xff]
  %v364 = vld [vmem:[%s5 + $0x28] sm:$0xff]
  %v365 = vld [vmem:[%s5 + $0x30] sm:$0xff]
  %v366 = vld [vmem:[%s5 + $0x38] sm:$0xff]
  %v367 = vld [vmem:[%s5 + $0x40] sm:$0xff]
  %v368 = vld [vmem:[%s5 + $0x48] sm:$0xff]
  %v369 = vld [vmem:[%s5 + $0x50] sm:$0xff]
  %v370 = vld [vmem:[%s5 + $0x58] sm:$0xff]
  %v371 = vld [vmem:[%s5 + $0x60] sm:$0xff]
  %v372 = vld [vmem:[%s5 + $0x68] sm:$0xff]
  %v373 = vld [vmem:[%s5 + $0x70] sm:$0xff]
  %v374 = vld [vmem:[%s5 + $0x78] sm:$0xff]
  %v375 = vld [vmem:[%s5 + $0x80] sm:$0xff]
  %v376 = vld [vmem:[%s5 + $0x88] sm:$0xff]
  %v377 = vld [vmem:[%s5 + $0x90] sm:$0xff]
  %v378 = vld [vmem:[%s5 + $0x98] sm:$0xff]
  %v379 = vld [vmem:[%s5 + $0xa0] sm:$0xff]
  %v380 = vld [vmem:[%s5 + $0xa8] sm:$0xff]
  %v381 = vld [vmem:[%s5 + $0xb0] sm:$0xff]
  %v382 = vld [vmem:[%s5 + $0xb8] sm:$0xff]
  %v383 = vld [vmem:[%s5 + $0xc0] sm:$0xff]
  %v384 = vld [vmem:[%s5 + $0xc8] sm:$0xff]
  %v385 = vld [vmem:[%s5 + $0xd0] sm:$0xff]
  %v386 = vld [vmem:[%s5 + $0xd8] sm:$0xff]
  %v387 = vld [vmem:[%s5 + $0xe0] sm:$0xff]
  %v388 = vld [vmem:[%s5 + $0xe8] sm:$0xff]
  %v389 = vld [vmem:[%s5 + $0xf0] sm:$0xff]
  %v390 = vld [vmem:[%s5 + $0xf8] sm:$0xff]
  %391 = vmatpush.msra.mxu0 %v389
  %392 = vmatpush.msra.mxu0 %v387
  %393 = vmatpush.msra.mxu0 %v385
  %394 = vmatpush.msra.mxu0 %v383
  %395 = vmatpush.msra.mxu0 %v381
  %396 = vmatpush.msra.mxu0 %v379
  %397 = vmatpush.msra.mxu0 %v377
  %398 = vmatpush.msra.mxu0 %v375
  %399 = vmatpush.msra.mxu0 %v373
  %400 = vmatpush.msra.mxu0 %v371
  %401 = vmatpush.msra.mxu0 %v369
  %402 = vmatpush.msra.mxu0 %v367
  %403 = vmatpush.msra.mxu0 %v365
  %404 = vmatpush.msra.mxu0 %v363
  %405 = vmatpush.msra.mxu0 %v361
  %406 = vmatpush.msra.mxu0 %v359
  %407 = vmatmul.f32.gmra.mxu0 %v356
  %v408 = vpop.f32.mrf.mxu0
  %v409 = vadd.f32 0.0, %v408
  %410 = vmatmul.f32.gmra.mxu0 %v358
  %v411 = vpop.f32.mrf.mxu0
  %v412 = vadd.f32 0.0, %v411
  %413 = vdwg.mxu0
  %414 = vmatpush.msra.mxu0 %v390
  %415 = vmatpush.msra.mxu0 %v388
  %416 = vmatpush.msra.mxu0 %v386
  %417 = vmatpush.msra.mxu0 %v384
  %418 = vmatpush.msra.mxu0 %v382
  %419 = vmatpush.msra.mxu0 %v380
  %420 = vmatpush.msra.mxu0 %v378
  %421 = vmatpush.msra.mxu0 %v376
  %422 = vmatpush.msra.mxu0 %v374
  %423 = vmatpush.msra.mxu0 %v372
  %424 = vmatpush.msra.mxu0 %v370
  %425 = vmatpush.msra.mxu0 %v368
  %426 = vmatpush.msra.mxu0 %v366
  %427 = vmatpush.msra.mxu0 %v364
  %428 = vmatpush.msra.mxu0 %v362
  %429 = vmatpush.msra.mxu0 %v360
  %430 = vmatmul.f32.gmra.mxu0 %v356
  %v431 = vpop.f32.mrf.mxu0
  %v432 = vadd.f32 0.0, %v431
  %433 = vmatmul.f32.gmra.mxu0 %v358
  %v434 = vpop.f32.mrf.mxu0
  %v435 = vadd.f32 0.0, %v434
  %436 = vdwg.mxu0
  %vm437 = vcmask 130048
  %v439 = vsel %vm437, %v356, 0
  %v442 = vsel %vm437, %v358, 0
  %444 = vmatpush.msra.mxu0 0.0
  %445 = vmatpush.msra.mxu0 0.0
  %446 = vmatpush.msra.mxu0 0.0
  %447 = vmatpush.msra.mxu0 0.0
  %448 = vmatpush.msra.mxu0 0.0
  %449 = vmatpush.msra.mxu0 0.0
  %450 = vmatpush.msra.mxu0 0.0
  %451 = vmatpush.msra.mxu0 0.0
  %452 = vmatpush.msra.mxu0 0.0
  %453 = vmatpush.msra.mxu0 0.0
  %454 = vmatpush.msra.mxu0 0.0
  %455 = vmatpush.msra.mxu0 0.0
  %456 = vmatpush.msra.mxu0 0.0
  %457 = vmatpush.msra.mxu0 0.0
  %458 = vmatpush.msra.mxu0 %v113
  %459 = vmatpush.msra.mxu0 %v110
  %460 = vmatmul.f32.gmra.mxu0 %v439
  %v461 = vpop.f32.mrf.mxu0
  %v462 = vadd.f32 0.0, %v461
  %463 = vmatmul.f32.gmra.mxu0 %v442
  %v464 = vpop.f32.mrf.mxu0
  %v465 = vadd.f32 0.0, %v464
  %466 = vdwg.mxu0
  %467 = vrot.lane.b32.xlu0 %v356, 112
  %v468 = vpop.permute.xlu0 %467
  %469 = vrot.lane.b32.xlu0 %v358, 112
  %v470 = vpop.permute.xlu0 %469
  %v471 = vsel %vm437, %v468, 0
  %v473 = vsel %vm437, %v470, 0
  %475 = vmatpush.msra.mxu0 0.0
  %476 = vmatpush.msra.mxu0 0.0
  %477 = vmatpush.msra.mxu0 0.0
  %478 = vmatpush.msra.mxu0 0.0
  %479 = vmatpush.msra.mxu0 0.0
  %480 = vmatpush.msra.mxu0 0.0
  %481 = vmatpush.msra.mxu0 0.0
  %482 = vmatpush.msra.mxu0 0.0
  %483 = vmatpush.msra.mxu0 0.0
  %484 = vmatpush.msra.mxu0 0.0
  %485 = vmatpush.msra.mxu0 0.0
  %486 = vmatpush.msra.mxu0 0.0
  %487 = vmatpush.msra.mxu0 0.0
  %488 = vmatpush.msra.mxu0 0.0
  %489 = vmatpush.msra.mxu0 %v119
  %490 = vmatpush.msra.mxu0 %v116
  %491 = vmatmul.f32.gmra.mxu0 %v471
  %v492 = vpop.f32.mrf.mxu0
  %v493 = vadd.f32 0.0, %v492
  %494 = vmatmul.f32.gmra.mxu0 %v473
  %v495 = vpop.f32.mrf.mxu0
  %v496 = vadd.f32 0.0, %v495
  %497 = vdwg.mxu0
  %498 = vrot.lane.b32.xlu0 %v356, 96
  %v499 = vpop.permute.xlu0 %498
  %500 = vrot.lane.b32.xlu0 %v358, 96
  %v501 = vpop.permute.xlu0 %500
  %v502 = vsel %vm437, %v499, 0
  %v504 = vsel %vm437, %v501, 0
  %506 = vmatpush.msra.mxu0 0.0
  %507 = vmatpush.msra.mxu0 0.0
  %508 = vmatpush.msra.mxu0 0.0
  %509 = vmatpush.msra.mxu0 0.0
  %510 = vmatpush.msra.mxu0 0.0
  %511 = vmatpush.msra.mxu0 0.0
  %512 = vmatpush.msra.mxu0 0.0
  %513 = vmatpush.msra.mxu0 0.0
  %514 = vmatpush.msra.mxu0 0.0
  %515 = vmatpush.msra.mxu0 0.0
  %516 = vmatpush.msra.mxu0 0.0
  %517 = vmatpush.msra.mxu0 0.0
  %518 = vmatpush.msra.mxu0 0.0
  %519 = vmatpush.msra.mxu0 0.0
  %520 = vmatpush.msra.mxu0 %v125
  %521 = vmatpush.msra.mxu0 %v122
  %522 = vmatmul.f32.gmra.mxu0 %v502
  %v523 = vpop.f32.mrf.mxu0
  %v524 = vadd.f32 0.0, %v523
  %525 = vmatmul.f32.gmra.mxu0 %v504
  %v526 = vpop.f32.mrf.mxu0
  %v527 = vadd.f32 0.0, %v526
  %528 = vdwg.mxu0
  %529 = vrot.lane.b32.xlu0 %v356, 80
  %v530 = vpop.permute.xlu0 %529
  %531 = vrot.lane.b32.xlu0 %v358, 80
  %v532 = vpop.permute.xlu0 %531
  %v533 = vsel %vm437, %v530, 0
  %v535 = vsel %vm437, %v532, 0
  %537 = vmatpush.msra.mxu0 0.0
  %538 = vmatpush.msra.mxu0 0.0
  %539 = vmatpush.msra.mxu0 0.0
  %540 = vmatpush.msra.mxu0 0.0
  %541 = vmatpush.msra.mxu0 0.0
  %542 = vmatpush.msra.mxu0 0.0
  %543 = vmatpush.msra.mxu0 0.0
  %544 = vmatpush.msra.mxu0 0.0
  %545 = vmatpush.msra.mxu0 0.0
  %546 = vmatpush.msra.mxu0 0.0
  %547 = vmatpush.msra.mxu0 0.0
  %548 = vmatpush.msra.mxu0 0.0
  %549 = vmatpush.msra.mxu0 0.0
  %550 = vmatpush.msra.mxu0 0.0
  %551 = vmatpush.msra.mxu0 %v131
  %552 = vmatpush.msra.mxu0 %v128
  %553 = vmatmul.f32.gmra.mxu0 %v533
  %v554 = vpop.f32.mrf.mxu0
  %v555 = vadd.f32 0.0, %v554
  %556 = vmatmul.f32.gmra.mxu0 %v535
  %v557 = vpop.f32.mrf.mxu0
  %v558 = vadd.f32 0.0, %v557
  %559 = vdwg.mxu0
  %560 = vrot.lane.b32.xlu0 %v356, 64
  %v561 = vpop.permute.xlu0 %560
  %562 = vrot.lane.b32.xlu0 %v358, 64
  %v563 = vpop.permute.xlu0 %562
  %v564 = vsel %vm437, %v561, 0
  %v566 = vsel %vm437, %v563, 0
  %568 = vmatpush.msra.mxu0 0.0
  %569 = vmatpush.msra.mxu0 0.0
  %570 = vmatpush.msra.mxu0 0.0
  %571 = vmatpush.msra.mxu0 0.0
  %572 = vmatpush.msra.mxu0 0.0
  %573 = vmatpush.msra.mxu0 0.0
  %574 = vmatpush.msra.mxu0 0.0
  %575 = vmatpush.msra.mxu0 0.0
  %576 = vmatpush.msra.mxu0 0.0
  %577 = vmatpush.msra.mxu0 0.0
  %578 = vmatpush.msra.mxu0 0.0
  %579 = vmatpush.msra.mxu0 0.0
  %580 = vmatpush.msra.mxu0 0.0
  %581 = vmatpush.msra.mxu0 0.0
  %582 = vmatpush.msra.mxu0 %v137
  %583 = vmatpush.msra.mxu0 %v134
  %584 = vmatmul.f32.gmra.mxu0 %v564
  %v585 = vpop.f32.mrf.mxu0
  %v586 = vadd.f32 0.0, %v585
  %587 = vmatmul.f32.gmra.mxu0 %v566
  %v588 = vpop.f32.mrf.mxu0
  %v589 = vadd.f32 0.0, %v588
  %590 = vdwg.mxu0
  %591 = vrot.lane.b32.xlu0 %v356, 48
  %v592 = vpop.permute.xlu0 %591
  %593 = vrot.lane.b32.xlu0 %v358, 48
  %v594 = vpop.permute.xlu0 %593
  %v595 = vsel %vm437, %v592, 0
  %v597 = vsel %vm437, %v594, 0
  %599 = vmatpush.msra.mxu0 0.0
  %600 = vmatpush.msra.mxu0 0.0
  %601 = vmatpush.msra.mxu0 0.0
  %602 = vmatpush.msra.mxu0 0.0
  %603 = vmatpush.msra.mxu0 0.0
  %604 = vmatpush.msra.mxu0 0.0
  %605 = vmatpush.msra.mxu0 0.0
  %606 = vmatpush.msra.mxu0 0.0
  %607 = vmatpush.msra.mxu0 0.0
  %608 = vmatpush.msra.mxu0 0.0
  %609 = vmatpush.msra.mxu0 0.0
  %610 = vmatpush.msra.mxu0 0.0
  %611 = vmatpush.msra.mxu0 0.0
  %612 = vmatpush.msra.mxu0 0.0
  %613 = vmatpush.msra.mxu0 %v143
  %614 = vmatpush.msra.mxu0 %v140
  %615 = vmatmul.f32.gmra.mxu0 %v595
  %v616 = vpop.f32.mrf.mxu0
  %v617 = vadd.f32 0.0, %v616
  %618 = vmatmul.f32.gmra.mxu0 %v597
  %v619 = vpop.f32.mrf.mxu0
  %v620 = vadd.f32 0.0, %v619
  %621 = vdwg.mxu0
  %622 = vrot.lane.b32.xlu0 %v356, 32
  %v623 = vpop.permute.xlu0 %622
  %624 = vrot.lane.b32.xlu0 %v358, 32
  %v625 = vpop.permute.xlu0 %624
  %v626 = vsel %vm437, %v623, 0
  %v628 = vsel %vm437, %v625, 0
  %630 = vmatpush.msra.mxu0 0.0
  %631 = vmatpush.msra.mxu0 0.0
  %632 = vmatpush.msra.mxu0 0.0
  %633 = vmatpush.msra.mxu0 0.0
  %634 = vmatpush.msra.mxu0 0.0
  %635 = vmatpush.msra.mxu0 0.0
  %636 = vmatpush.msra.mxu0 0.0
  %637 = vmatpush.msra.mxu0 0.0
  %638 = vmatpush.msra.mxu0 0.0
  %639 = vmatpush.msra.mxu0 0.0
  %640 = vmatpush.msra.mxu0 0.0
  %641 = vmatpush.msra.mxu0 0.0
  %642 = vmatpush.msra.mxu0 0.0
  %643 = vmatpush.msra.mxu0 0.0
  %644 = vmatpush.msra.mxu0 %v149
  %645 = vmatpush.msra.mxu0 %v146
  %646 = vmatmul.f32.gmra.mxu0 %v626
  %v647 = vpop.f32.mrf.mxu0
  %v648 = vadd.f32 0.0, %v647
  %649 = vmatmul.f32.gmra.mxu0 %v628
  %v650 = vpop.f32.mrf.mxu0
  %v651 = vadd.f32 0.0, %v650
  %652 = vdwg.mxu0
  %653 = vrot.lane.b32.xlu0 %v356, 16
  %v654 = vpop.permute.xlu0 %653
  %655 = vrot.lane.b32.xlu0 %v358, 16
  %v656 = vpop.permute.xlu0 %655
  %v657 = vsel %vm437, %v654, 0
  %v659 = vsel %vm437, %v656, 0
  %661 = vmatpush.msra.mxu0 0.0
  %662 = vmatpush.msra.mxu0 0.0
  %663 = vmatpush.msra.mxu0 0.0
  %664 = vmatpush.msra.mxu0 0.0
  %665 = vmatpush.msra.mxu0 0.0
  %666 = vmatpush.msra.mxu0 0.0
  %667 = vmatpush.msra.mxu0 0.0
  %668 = vmatpush.msra.mxu0 0.0
  %669 = vmatpush.msra.mxu0 0.0
  %670 = vmatpush.msra.mxu0 0.0
  %671 = vmatpush.msra.mxu0 0.0
  %672 = vmatpush.msra.mxu0 0.0
  %673 = vmatpush.msra.mxu0 0.0
  %674 = vmatpush.msra.mxu0 0.0
  %675 = vmatpush.msra.mxu0 %v155
  %676 = vmatpush.msra.mxu0 %v152
  %677 = vmatmul.f32.gmra.mxu0 %v657
  %v678 = vpop.f32.mrf.mxu0
  %v679 = vadd.f32 0.0, %v678
  %680 = vmatmul.f32.gmra.mxu0 %v659
  %v681 = vpop.f32.mrf.mxu0
  %v682 = vadd.f32 0.0, %v681
  %683 = vdwg.mxu0
  %686 = vrot.lane.b32.xlu0 %v493, 32
  %v687 = vpop.permute.xlu0 %686
  %688 = vrot.lane.b32.xlu0 %v496, 32
  %v689 = vpop.permute.xlu0 %688
  %694 = vrot.lane.b32.xlu0 %v524, 64
  %v695 = vpop.permute.xlu0 %694
  %696 = vrot.lane.b32.xlu0 %v527, 64
  %v697 = vpop.permute.xlu0 %696
  %702 = vrot.lane.b32.xlu0 %v555, 96
  %v703 = vpop.permute.xlu0 %702
  %704 = vrot.lane.b32.xlu0 %v558, 96
  %v705 = vpop.permute.xlu0 %704
  %710 = vrot.lane.b32.xlu0 %v617, 32
  %v711 = vpop.permute.xlu0 %710
  %712 = vrot.lane.b32.xlu0 %v620, 32
  %v713 = vpop.permute.xlu0 %712
  %718 = vrot.lane.b32.xlu0 %v648, 64
  %v719 = vpop.permute.xlu0 %718
  %720 = vrot.lane.b32.xlu0 %v651, 64
  %v721 = vpop.permute.xlu0 %720
  %726 = vrot.lane.b32.xlu0 %v679, 96
  %v727 = vpop.permute.xlu0 %726
  %728 = vrot.lane.b32.xlu0 %v682, 96
  %v729 = vpop.permute.xlu0 %728
  %v732 = vsel %vm43, %v462, %v687
  %v733 = vsel %vm43, %v465, %v689
  %vm734 = vcmask 523264
  %v735 = vsel %vm734, %v732, %v695
  %v736 = vsel %vm734, %v733, %v697
  %vm737 = vcmask 785408
  %v738 = vsel %vm737, %v735, %v703
  %v739 = vsel %vm737, %v736, %v705
  %v740 = vsel %vm43, %v586, %v711
  %v741 = vsel %vm43, %v589, %v713
  %v742 = vsel %vm734, %v740, %v719
  %v743 = vsel %vm734, %v741, %v721
  %v744 = vsel %vm737, %v742, %v727
  %v745 = vsel %vm737, %v743, %v729
  %v746 = vrcp.pop %v409
  %v747 = vrcp.pop %v432
  %v748 = vrcp.pop %v412
  %v749 = vrcp.pop %v435
  %v750 = vmul.f32 %v738, %v746
  %v751 = vmul.f32 %v744, %v747
  %v752 = vmul.f32 %v739, %v748
  %v753 = vmul.f32 %v745, %v749
  %vm754 = vcmp.ge.f32.partialorder %v750, 0.0
  %vm755 = vcmp.ge.f32.partialorder %v751, 0.0
  %vm756 = vcmp.ge.f32.partialorder %v752, 0.0
  %vm757 = vcmp.ge.f32.partialorder %v753, 0.0
  %v758 = vmul.f32 %v750, 0.01
  %v759 = vmul.f32 %v751, 0.01
  %v760 = vmul.f32 %v752, 0.01
  %v761 = vmul.f32 %v753, 0.01
  %v762 = vsel %vm754, %v750, %v758
  %v763 = vsel %vm755, %v751, %v759
  %v764 = vsel %vm756, %v752, %v760
  %v765 = vsel %vm757, %v753, %v761
  %v766 = vsub.f32 %v226, %v762
  %v767 = vsub.f32 %v227, %v763
  %v768 = vsub.f32 %v228, %v764
  %v769 = vsub.f32 %v229, %v765
  %770 = vst [vmem:[%s6] sm:$0xff] %v766
  %771 = vst [vmem:[%s6 + $0x8] sm:$0xff] %v767
  %772 = vst [vmem:[%s6 + $0x10] sm:$0xff] %v768
  %773 = vst [vmem:[%s6 + $0x18] sm:$0xff] %v769
  // Predicated region
  $region26: #{gat_forward.1} parent=0 // pred_check
    _
  $region27: #{gat_forward.1} parent=0 // pred_check_branch
    %775 = sbr.rel (0) target = $region29
  $region28: #{gat_forward.1} parent=0 // pred_region
    _
  $region29: #{gat_forward.1} parent=0 // pred_fallthru
    _
  // Predicated region
  $region30: #{gat_forward.1} parent=0 // pred_check
    _
  $region31: #{gat_forward.1} parent=0 // pred_check_branch
    %777 = sbr.rel (0) target = $region33
  $region32: #{gat_forward.1} parent=0 // pred_region
    _
  $region33: #{gat_forward.1} parent=0 // pred_fallthru
    _

</llo_original>
